<compile_context>
chip_gen: v6e
topology: v6e:2x2x1
jax: 0.10.0
libtpu: 0.0.40
codegen_flags: <defaults>
</compile_context>

<pallas_src>
import math

import jax
import jax.numpy as jnp
from jax.experimental import pallas as pl
from jax.experimental.pallas import tpu as pltpu

EPS = 1e-5


def _round_up(x, m):
    return (x + m - 1) // m * m


def _vmem_budget():
    """(physical VMEM capacity, budget for pipelined blocks)."""
    cap = 64 * 1024 * 1024  # conservative default = v7x per-TensorCore VMEM
    try:
        cap = int(pltpu.get_tpu_info().vmem_capacity_bytes)
    except Exception:
        pass
    budget = min(int(cap * 0.4), 48 * 1024 * 1024)
    return cap, budget


def _choose_tiles(N, Fp, Ep, out_bytes, budget):
    """Pick (row tile TN, column tile TE) so double-buffered blocks fit the budget."""
    # E tile: keep the double-buffered bf16 weight block within ~half the budget
    # (tiles E only for very large weights, e.g. the v7x 64-MiB-VMEM concern).
    te = Ep
    while te > 512 and 2 * (Fp * te * 2) > budget // 2:
        half = te // 2
        if half % 128 == 0 and Ep % half == 0:
            te = half
        else:
            break
    # Row tile: x (f32, double-buffered) + output (double-buffered) + f32 matmul temp.
    rem = max(budget - 2 * (Fp * te * 2), budget // 4)
    per_row = 2 * (4 * Fp) + 2 * (out_bytes * te) + 4 * te
    tn = max(rem // per_row, 8)
    if tn >= 256:
        tn = (tn // 256) * 256      # keep the MXU M dimension fully fed (v6e 256x256)
    else:
        tn = (tn // 8) * 8
    tn = min(tn, 2048, _round_up(N, 8))
    tn = max(tn, 8)
    return int(tn), int(te)


def _make_fused_kernel(n_rows, eps):
    inv_n = 1.0 / float(n_rows)

    def kernel(x_ref, w_ref, gb_ref, o_ref, stats_ref):
        p = pl.program_id(0)   # phase: 0 = statistics, 1 = normalize + write
        j = pl.program_id(1)   # E (column) tile
        i = pl.program_id(2)   # row tile

        # Shared matmul for both phases: bf16 MXU inputs, f32 accumulation.
        y = jnp.dot(x_ref[...].astype(jnp.bfloat16), w_ref[...],
                    preferred_element_type=jnp.float32)          # (TN, TE) f32

        @pl.when((p == 0) & (j == 0) & (i == 0))
        def _init():
            stats_ref[...] = jnp.zeros_like(stats_ref)

        @pl.when(p == 0)
        def _accumulate():
            stats_ref[j, 0:1, :] += jnp.sum(y, axis=0, keepdims=True)
            stats_ref[j, 1:2, :] += jnp.sum(y * y, axis=0, keepdims=True)

        @pl.when((p == 1) & (i == 0))
        def _finalize():
            # TODO(synk): one-pass E[y^2]-E[y]^2 can lose precision for channels with
            # |mean| >> std; a Welford-style centered combine would be more robust.
            mean = stats_ref[j, 0:1, :] * inv_n
            var = jnp.maximum(stats_ref[j, 1:2, :] * inv_n - mean * mean, 0.0)
            inv_std = jax.lax.rsqrt(var + eps)
            scale = gb_ref[0:1, :] * inv_std
            shift = gb_ref[1:2, :] - mean * scale
            stats_ref[j, 0:1, :] = scale          # reuse scratch for scale / shift
            stats_ref[j, 1:2, :] = shift

        @pl.when(p == 1)
        def _normalize():
            scale = stats_ref[j, 0:1, :]
            shift = stats_ref[j, 1:2, :]
            o_ref[...] = jnp.maximum(y * scale + shift, 0.0).astype(o_ref.dtype)

    return kernel


def v_encoder_forward(src, weight, bias, gamma, beta, *, out_dtype=jnp.float32):
    """src: (B, T, F) -> (B, T, E).  weight is stored as (F, E)."""
    # The linear bias is algebraically cancelled by the BN mean subtraction; kept for
    # API parity with nn.Linear but unused.
    del bias
    B, T, F = src.shape
    E = weight.shape[1]
    N = B * T

    Fp = _round_up(F, 128)
    Ep = _round_up(E, 128)
    out_bytes = jnp.dtype(out_dtype).itemsize

    cap, budget = _vmem_budget()
    TN, TE = _choose_tiles(N, Fp, Ep, out_bytes, budget)
    Np = _round_up(max(N, TN), TN)
    nR = Np // TN
    nE = Ep // TE

    # Zero-pad rows / features (zeros contribute exactly 0 to the statistics).
    x = src.reshape(N, F)
    if (Np != N) or (Fp != F):
        x = jnp.pad(x, ((0, Np - N), (0, Fp - F)))

    # NOTE: in a training loop the padded bf16 weight should be precast once and
    # reused across steps instead of recast every forward.
    w = weight
    if (Fp != F) or (Ep != E):
        w = jnp.pad(w, ((0, Fp - F), (0, Ep - E)))
    wb = w.astype(jnp.bfloat16)

    gb = jnp.zeros((2, Ep), jnp.float32)
    gb = gb.at[0, :E].set(gamma.astype(jnp.float32))
    gb = gb.at[1, :E].set(beta.astype(jnp.float32))

    kernel = _make_fused_kernel(N, EPS)

    # Derive the scoped-VMEM limit from the actual per-step footprint (with headroom)
    # instead of a hard-coded constant, and keep it below the physical capacity.
    footprint = (
        2 * (TN * Fp * 4)            # x blocks (f32, double-buffered)
        + 2 * (Fp * TE * 2)          # weight blocks (bf16, double-buffered)
        + 2 * (TN * TE * out_bytes)  # output blocks (double-buffered)
        + 2 * (8 * TE * 4)           # gamma/beta block (sublane-padded)
        + TN * TE * 4                # f32 matmul temporary
        + nE * 8 * TE * 4            # stats scratch (sublane-padded)
    )
    vmem_limit = int(min(max(footprint + 16 * 1024 * 1024, 32 * 1024 * 1024),
                         cap - 8 * 1024 * 1024))

    out = pl.pallas_call(
        kernel,
        out_shape=jax.ShapeDtypeStruct((Np, Ep), out_dtype),
        grid_spec=pltpu.PrefetchScalarGridSpec(
            num_scalar_prefetch=0,
            grid=(2, nE, nR),
            in_specs=[
                pl.BlockSpec((TN, Fp), lambda p, j, i: (i, 0)),   # x row tile
                pl.BlockSpec((Fp, TE), lambda p, j, i: (0, j)),   # weight column tile
                pl.BlockSpec((2, TE), lambda p, j, i: (0, j)),    # gamma/beta tile
            ],
            # Phase 0 parks on block (0, 0) (never written -> never written back);
            # phase 1 writes each output block exactly once.
            out_specs=pl.BlockSpec((TN, TE), lambda p, j, i: (p * i, p * j)),
            scratch_shapes=[pltpu.VMEM((nE, 2, TE), jnp.float32)],
        ),
        compiler_params=pltpu.CompilerParams(
            # The stats accumulator carries state across all grid axes -> "arbitrary".
            dimension_semantics=("arbitrary", "arbitrary", "arbitrary"),
            vmem_limit_bytes=vmem_limit,
        ),
        cost_estimate=pl.CostEstimate(
            flops=4 * Np * Fp * Ep,
            transcendentals=Ep,
            bytes_accessed=(2 * nE * Np * Fp * 4 + 2 * Fp * Ep * 2
                            + Np * Ep * out_bytes + 2 * Ep * 4),
        ),
    )(x, wb, gb)

    if (Np != N) or (Ep != E):
        out = out[:N, :E]
    return out.reshape(B, T, E)


def init_params(key, feature_size, emb_size):
    """Matches the PyTorch module's __init__:
       Linear weight: xavier_uniform_ with gain = calculate_gain('relu') = sqrt(2)
       Linear bias  : PyTorch default uniform(-1/sqrt(fan_in), 1/sqrt(fan_in))
       BatchNorm1d  : weight = 1, bias = 0
    Weight is stored already transposed to (F, E) so the kernel computes x @ W directly.
    """
    k_w, k_b = jax.random.split(key)
    gain = math.sqrt(2.0)
    bound_w = gain * math.sqrt(6.0 / (feature_size + emb_size))
    weight = jax.random.uniform(
        k_w, (feature_size, emb_size), jnp.float32, minval=-bound_w, maxval=bound_w
    )
    bound_b = 1.0 / math.sqrt(feature_size)
    bias = jax.random.uniform(
        k_b, (emb_size,), jnp.float32, minval=-bound_b, maxval=bound_b
    )
    gamma = jnp.ones((emb_size,), jnp.float32)
    beta = jnp.zeros((emb_size,), jnp.float32)
    return weight, bias, gamma, beta


if __name__ == "__main__":
    B, T = 2, 8
    feature_size, emb_size = 16, 32

    key = jax.random.PRNGKey(0)
    k_x, k_p = jax.random.split(key)
    src = jax.random.normal(k_x, (B, T, feature_size), jnp.float32)
    weight, bias, gamma, beta = init_params(k_p, feature_size, emb_size)

    fwd = jax.jit(v_encoder_forward)
    out = jax.block_until_ready(fwd(src, weight, bias, gamma, beta))
    assert out.shape == (B, T, emb_size)

    N = B * T
    x2 = src.reshape(N, feature_size)

    # Matched-precision reference: bf16 matmul inputs, f32 accumulation, includes the
    # bias (which BN cancels) — the kernel should agree closely.
    yb = jnp.dot(
        x2.astype(jnp.bfloat16),
        weight.astype(jnp.bfloat16),
        preferred_element_type=jnp.float32,
    ) + bias[None, :]
    mub = jnp.mean(yb, axis=0, keepdims=True)
    vab = jnp.mean((yb - mub) ** 2, axis=0, keepdims=True)
    refb = jnp.maximum((yb - mub) * jax.lax.rsqrt(vab + EPS) * gamma + beta, 0.0)
    refb = refb.reshape(B, T, emb_size)

    # Full-f32 reference (module semantics) — looser tolerance due to bf16 MXU inputs.
    y32 = x2 @ weight + bias[None, :]
    mu = jnp.mean(y32, axis=0, keepdims=True)
    va = jnp.mean((y32 - mu) ** 2, axis=0, keepdims=True)
    ref32 = jnp.maximum((y32 - mu) * jax.lax.rsqrt(va + EPS) * gamma + beta, 0.0)
    ref32 = ref32.reshape(B, T, emb_size)

    err_b = float(jnp.max(jnp.abs(out - refb)))
    err_32 = float(jnp.max(jnp.abs(out - ref32)))
    assert jnp.allclose(out, refb, atol=5e-3, rtol=5e-3), err_b
    assert jnp.allclose(out, ref32, atol=5e-2, rtol=5e-2), err_32

    print("KERNEL_OK")
</pallas_src>

<mosaic_0001>
module attributes {stable_mosaic.version = 11 : i64} {
  func.func @kernel(%arg0: i32, %arg1: i32, %arg2: i32, %arg3: memref<16x128xf32, #tpu.memory_space<vmem>>, %arg4: memref<128x128xbf16, #tpu.memory_space<vmem>>, %arg5: memref<2x128xf32, #tpu.memory_space<vmem>>, %arg6: memref<16x128xf32, #tpu.memory_space<vmem>>, %arg7: memref<1x2x128xf32, #tpu.memory_space<vmem>>) attributes {dimension_semantics = [#tpu.dimension_semantics<arbitrary>, #tpu.dimension_semantics<arbitrary>, #tpu.dimension_semantics<arbitrary>], iteration_bounds = array<i64: 2, 1, 1>, scalar_prefetch = 0 : i64, scratch_operands = 1 : i64, tpu.core_type = #tpu.core_type<tc>, window_params = [{transform_indices = @transform_0, window_bounds = array<i64: 16, 128>}, {transform_indices = @transform_1, window_bounds = array<i64: 128, 128>}, {transform_indices = @transform_2, window_bounds = array<i64: 2, 128>}, {transform_indices = @transform_3, window_bounds = array<i64: 16, 128>}]} {
    %c0 = arith.constant 0 : index
    %c0_0 = arith.constant 0 : index
    %0 = vector.load %arg3[%c0, %c0_0] : memref<16x128xf32, #tpu.memory_space<vmem>>, vector<16x128xf32>
    %1 = arith.truncf %0 : vector<16x128xf32> to vector<16x128xbf16>
    %c0_1 = arith.constant 0 : index
    %c0_2 = arith.constant 0 : index
    %2 = vector.load %arg4[%c0_1, %c0_2] : memref<128x128xbf16, #tpu.memory_space<vmem>>, vector<128x128xbf16>
    %cst = arith.constant dense<0.000000e+00> : vector<16x128xf32>
    %3 = tpu.matmul %1, %2, %cst {dimension_numbers = #tpu.dot_dimension_numbers<[1], [0], [0], [1], [0, 0, 1, 1], [], []>} : vector<16x128xbf16>, vector<128x128xbf16>, vector<16x128xf32> -> vector<16x128xf32>
    %c0_i32 = arith.constant 0 : i32
    %4 = arith.cmpi eq, %arg0, %c0_i32 : i32
    %c0_i32_3 = arith.constant 0 : i32
    %5 = arith.cmpi eq, %arg1, %c0_i32_3 : i32
    %6 = arith.andi %4, %5 : i1
    %c0_i32_4 = arith.constant 0 : i32
    %7 = arith.cmpi eq, %arg2, %c0_i32_4 : i32
    %8 = arith.andi %6, %7 : i1
    %9 = arith.extui %8 : i1 to i32
    %c0_i32_5 = arith.constant 0 : i32
    %10 = arith.cmpi ne, %9, %c0_i32_5 : i32
    scf.if %10 {
      %cst_12 = arith.constant 0.000000e+00 : f32
      %22 = vector.broadcast %cst_12 : f32 to vector<1x2x128xf32>
      %c0_13 = arith.constant 0 : index
      %c0_14 = arith.constant 0 : index
      %c0_15 = arith.constant 0 : index
      %23 = vector.load %arg7[%c0_13, %c0_14, %c0_15] : memref<1x2x128xf32, #tpu.memory_space<vmem>>, vector<1x2x128xf32>
      tpu.vector_store %arg7[%c0_13, %c0_14, %c0_15], %22 {strides = array<i32>} : memref<1x2x128xf32, #tpu.memory_space<vmem>>, vector<1x2x128xf32>,
    } else {
    }
    %c0_i32_6 = arith.constant 0 : i32
    %11 = arith.cmpi eq, %arg0, %c0_i32_6 : i32
    %12 = arith.extui %11 : i1 to i32
    %c0_i32_7 = arith.constant 0 : i32
    %13 = arith.cmpi ne, %12, %c0_i32_7 : i32
    scf.if %13 {
      %22 = arith.index_cast %arg1 : i32 to index
      %c0_12 = arith.constant 0 : index
      %c0_13 = arith.constant 0 : index
      %23 = vector.load %arg7[%22, %c0_12, %c0_13] : memref<1x2x128xf32, #tpu.memory_space<vmem>>, vector<1x1x128xf32>
      %24 = vector.shape_cast %23 : vector<1x1x128xf32> to vector<1x128xf32>
      %cst_14 = arith.constant dense<0.000000e+00> : vector<128xf32>
      %25 = vector.multi_reduction <add>, %3, %cst_14 [0] : vector<16x128xf32> to vector<128xf32>
      %26 = vector.shape_cast %25 : vector<128xf32> to vector<1x128xf32>
      %27 = arith.addf %24, %26 : vector<1x128xf32>
      %28 = arith.index_cast %arg1 : i32 to index
      %c0_15 = arith.constant 0 : index
      %c0_16 = arith.constant 0 : index
      %29 = vector.load %arg7[%28, %c0_15, %c0_16] : memref<1x2x128xf32, #tpu.memory_space<vmem>>, vector<1x1x128xf32>
      %30 = vector.shape_cast %29 : vector<1x1x128xf32> to vector<1x128xf32>
      %31 = vector.shape_cast %27 : vector<1x128xf32> to vector<1x1x128xf32>
      tpu.vector_store %arg7[%28, %c0_15, %c0_16], %31 {strides = array<i32>} : memref<1x2x128xf32, #tpu.memory_space<vmem>>, vector<1x1x128xf32>,
      %32 = arith.index_cast %arg1 : i32 to index
      %c1 = arith.constant 1 : index
      %c0_17 = arith.constant 0 : index
      %33 = vector.load %arg7[%32, %c1, %c0_17] : memref<1x2x128xf32, #tpu.memory_space<vmem>>, vector<1x1x128xf32>
      %34 = vector.shape_cast %33 : vector<1x1x128xf32> to vector<1x128xf32>
      %35 = arith.mulf %3, %3 : vector<16x128xf32>
      %cst_18 = arith.constant dense<0.000000e+00> : vector<128xf32>
      %36 = vector.multi_reduction <add>, %35, %cst_18 [0] : vector<16x128xf32> to vector<128xf32>
      %37 = vector.shape_cast %36 : vector<128xf32> to vector<1x128xf32>
      %38 = arith.addf %34, %37 : vector<1x128xf32>
      %39 = arith.index_cast %arg1 : i32 to index
      %c1_19 = arith.constant 1 : index
      %c0_20 = arith.constant 0 : index
      %40 = vector.load %arg7[%39, %c1_19, %c0_20] : memref<1x2x128xf32, #tpu.memory_space<vmem>>, vector<1x1x128xf32>
      %41 = vector.shape_cast %40 : vector<1x1x128xf32> to vector<1x128xf32>
      %42 = vector.shape_cast %38 : vector<1x128xf32> to vector<1x1x128xf32>
      tpu.vector_store %arg7[%39, %c1_19, %c0_20], %42 {strides = array<i32>} : memref<1x2x128xf32, #tpu.memory_space<vmem>>, vector<1x1x128xf32>,
    } else {
    }
    %c1_i32 = arith.constant 1 : i32
    %14 = arith.cmpi eq, %arg0, %c1_i32 : i32
    %c0_i32_8 = arith.constant 0 : i32
    %15 = arith.cmpi eq, %arg2, %c0_i32_8 : i32
    %16 = arith.andi %14, %15 : i1
    %17 = arith.extui %16 : i1 to i32
    %c0_i32_9 = arith.constant 0 : i32
    %18 = arith.cmpi ne, %17, %c0_i32_9 : i32
    scf.if %18 {
      %22 = arith.index_cast %arg1 : i32 to index
      %c0_12 = arith.constant 0 : index
      %c0_13 = arith.constant 0 : index
      %23 = vector.load %arg7[%22, %c0_12, %c0_13] : memref<1x2x128xf32, #tpu.memory_space<vmem>>, vector<1x1x128xf32>
      %24 = vector.shape_cast %23 : vector<1x1x128xf32> to vector<1x128xf32>
      %cst_14 = arith.constant 6.250000e-02 : f32
      %25 = vector.broadcast %cst_14 : f32 to vector<1x128xf32>
      %26 = arith.mulf %24, %25 : vector<1x128xf32>
      %27 = arith.index_cast %arg1 : i32 to index
      %c1 = arith.constant 1 : index
      %c0_15 = arith.constant 0 : index
      %28 = vector.load %arg7[%27, %c1, %c0_15] : memref<1x2x128xf32, #tpu.memory_space<vmem>>, vector<1x1x128xf32>
      %29 = vector.shape_cast %28 : vector<1x1x128xf32> to vector<1x128xf32>
      %cst_16 = arith.constant 6.250000e-02 : f32
      %30 = vector.broadcast %cst_16 : f32 to vector<1x128xf32>
      %31 = arith.mulf %29, %30 : vector<1x128xf32>
      %32 = arith.mulf %26, %26 : vector<1x128xf32>
      %33 = arith.subf %31, %32 : vector<1x128xf32>
      %cst_17 = arith.constant 0.000000e+00 : f32
      %34 = vector.broadcast %cst_17 : f32 to vector<1x128xf32>
      %35 = arith.maximumf %33, %34 : vector<1x128xf32>
      %cst_18 = arith.constant 9.99999974E-6 : f32
      %36 = vector.broadcast %cst_18 : f32 to vector<1x128xf32>
      %37 = arith.addf %35, %36 : vector<1x128xf32>
      %38 = math.rsqrt %37 : vector<1x128xf32>
      %c0_19 = arith.constant 0 : index
      %c0_20 = arith.constant 0 : index
      %39 = vector.load %arg5[%c0_19, %c0_20] : memref<2x128xf32, #tpu.memory_space<vmem>>, vector<1x128xf32>
      %40 = arith.mulf %39, %38 : vector<1x128xf32>
      %c1_21 = arith.constant 1 : index
      %c0_22 = arith.constant 0 : index
      %41 = vector.load %arg5[%c1_21, %c0_22] : memref<2x128xf32, #tpu.memory_space<vmem>>, vector<1x128xf32>
      %42 = arith.mulf %26, %40 : vector<1x128xf32>
      %43 = arith.subf %41, %42 : vector<1x128xf32>
      %44 = arith.index_cast %arg1 : i32 to index
      %c0_23 = arith.constant 0 : index
      %c0_24 = arith.constant 0 : index
      %45 = vector.load %arg7[%44, %c0_23, %c0_24] : memref<1x2x128xf32, #tpu.memory_space<vmem>>, vector<1x1x128xf32>
      %46 = vector.shape_cast %45 : vector<1x1x128xf32> to vector<1x128xf32>
      %47 = vector.shape_cast %40 : vector<1x128xf32> to vector<1x1x128xf32>
      tpu.vector_store %arg7[%44, %c0_23, %c0_24], %47 {strides = array<i32>} : memref<1x2x128xf32, #tpu.memory_space<vmem>>, vector<1x1x128xf32>,
      %48 = arith.index_cast %arg1 : i32 to index
      %c1_25 = arith.constant 1 : index
      %c0_26 = arith.constant 0 : index
      %49 = vector.load %arg7[%48, %c1_25, %c0_26] : memref<1x2x128xf32, #tpu.memory_space<vmem>>, vector<1x1x128xf32>
      %50 = vector.shape_cast %49 : vector<1x1x128xf32> to vector<1x128xf32>
      %51 = vector.shape_cast %43 : vector<1x128xf32> to vector<1x1x128xf32>
      tpu.vector_store %arg7[%48, %c1_25, %c0_26], %51 {strides = array<i32>} : memref<1x2x128xf32, #tpu.memory_space<vmem>>, vector<1x1x128xf32>,
    } else {
    }
    %c1_i32_10 = arith.constant 1 : i32
    %19 = arith.cmpi eq, %arg0, %c1_i32_10 : i32
    %20 = arith.extui %19 : i1 to i32
    %c0_i32_11 = arith.constant 0 : i32
    %21 = arith.cmpi ne, %20, %c0_i32_11 : i32
    scf.if %21 {
      %22 = arith.index_cast %arg1 : i32 to index
      %c0_12 = arith.constant 0 : index
      %c0_13 = arith.constant 0 : index
      %23 = vector.load %arg7[%22, %c0_12, %c0_13] : memref<1x2x128xf32, #tpu.memory_space<vmem>>, vector<1x1x128xf32>
      %24 = vector.shape_cast %23 : vector<1x1x128xf32> to vector<1x128xf32>
      %25 = arith.index_cast %arg1 : i32 to index
      %c1 = arith.constant 1 : index
      %c0_14 = arith.constant 0 : index
      %26 = vector.load %arg7[%25, %c1, %c0_14] : memref<1x2x128xf32, #tpu.memory_space<vmem>>, vector<1x1x128xf32>
      %27 = vector.shape_cast %26 : vector<1x1x128xf32> to vector<1x128xf32>
      %28 = vector.broadcast %24 : vector<1x128xf32> to vector<16x128xf32>
      %29 = arith.mulf %3, %28 : vector<16x128xf32>
      %30 = vector.broadcast %27 : vector<1x128xf32> to vector<16x128xf32>
      %31 = arith.addf %29, %30 : vector<16x128xf32>
      %cst_15 = arith.constant 0.000000e+00 : f32
      %32 = vector.broadcast %cst_15 : f32 to vector<16x128xf32>
      %33 = arith.maximumf %31, %32 : vector<16x128xf32>
      %c0_16 = arith.constant 0 : index
      %c0_17 = arith.constant 0 : index
      %34 = vector.load %arg6[%c0_16, %c0_17] : memref<16x128xf32, #tpu.memory_space<vmem>>, vector<16x128xf32>
      tpu.vector_store %arg6[%c0_16, %c0_17], %33 {strides = array<i32>} : memref<16x128xf32, #tpu.memory_space<vmem>>, vector<16x128xf32>,
    } else {
    }
    return
  }
  func.func @transform_0(%arg0: i32, %arg1: i32, %arg2: i32) -> (i32, i32) {
    %c0_i32 = arith.constant 0 : i32
    %c0_i32_0 = arith.constant 0 : i32
    return %arg2, %c0_i32 : i32, i32
  }
  func.func @transform_1(%arg0: i32, %arg1: i32, %arg2: i32) -> (i32, i32) {
    %c0_i32 = arith.constant 0 : i32
    %c0_i32_0 = arith.constant 0 : i32
    return %c0_i32, %arg1 : i32, i32
  }
  func.func @transform_2(%arg0: i32, %arg1: i32, %arg2: i32) -> (i32, i32) {
    %c0_i32 = arith.constant 0 : i32
    %c0_i32_0 = arith.constant 0 : i32
    return %c0_i32, %arg1 : i32, i32
  }
  func.func @transform_3(%arg0: i32, %arg1: i32, %arg2: i32) -> (i32, i32) {
    %0 = arith.muli %arg0, %arg2 : i32
    %1 = arith.muli %arg0, %arg1 : i32
    %c0_i32 = arith.constant 0 : i32
    return %0, %1 : i32, i32
  }
}

</mosaic_0001>

<llo_original>
// kernel: v_encoder_forward.1
$region0: #{v_encoder_forward.1}
  #allocation0 [shape = 'u32[]', space=smem, size = 0x4, offset = 0x4, fixed_abs, tag = 'smem constant byte address 0x4 - core index']
  #allocation1 [shape = 'u32[144,128]{1,0:T(1,128)}', space=vmem, size = 0x12000, scoped, tag = 'internal scratch']
  #allocation2 [shape = 'f32[1,2,128]{2,1,0:T(2,128)}', space=vmem, size = 0x400, scoped, tag = 'scratch operand']
  %s0 = inlined_call_operand.vmem [shape: f32[16,128], index: 0, kind: input, shape index: {}]
  %s1 = inlined_call_operand.vmem [shape: bf16[128,128], index: 1, kind: input, shape index: {}]
  %s2 = inlined_call_operand.vmem [shape: f32[2,128], index: 2, kind: input, shape index: {}]
  %s3 = inlined_call_operand.vmem [shape: f32[16,128], index: 3, kind: output, shape index: {}]
  %s4 = sld [smem:[#allocation0]]
  $region61: #{v_encoder_forward.1} parent=0
    _
  %s6 = ssub.s32 1, %s4
  %s7 = scalar_select 0, %s6, %s4
  loop: start=0, step=1, limit=4
  $region2: #{v_encoder_forward.1} parent=0 // loop_pre_header
    _
  $region3: #{v_encoder_forward.1} parent=0 // loop_header
    %s9 = sphi 0, %s13
    %p10 = scmp.ge.s32.totalorder %s9, 4
    %s16 = sphi 0, %s35
    %s17 = sphi 0, %s31
    %s18 = sphi 0, %s27
    %s19 = sphi 0, %s16
    %s20 = sphi 0, %s17
    %s21 = sphi 0, %s18
    %s22 = sphi 0, %s19
    %s23 = sphi 0, %s20
    %s24 = sphi 0, %s21
    %s38 = sphi 0, %s40
    %s41 = sphi 0, %s38
    %s42 = sphi 0, %s41
    %s58 = sphi 0, %s42
    %s64 = sphi 0, %s66
    %s67 = sphi 0, %s64
    %s68 = sphi 0, %s67
    %s84 = sphi 0, %s68
    %s90 = sphi 0, %s92
    %s93 = sphi 0, %s90
    %s94 = sphi 0, %s93
    %s110 = sphi 0, %s94
    %s122 = sphi 0, %s124
    %s125 = sphi 0, %s122
    %s126 = sphi 0, %s125
    %s142 = sphi 0, %s126
  $region4: #{v_encoder_forward.1} parent=0 // loop_header_branch
    %12 = sbr.rel (%p10) target = $region8
  $region5: #{v_encoder_forward.1} parent=0 // loop_body
    %s14 = ssub.s32 %s9, 1
    %s15 = ssub.s32 %s9, 2
    %s25 = sadd.s32 1, %s18
    %p26 = scmp.ge.s32.totalorder %s25, 1
    %s27 = scalar_select %p26, 0, %s25
    %s28 = sadd.s32 1, %s17
    %s29 = scalar_select %p26, %s28, %s17
    %p30 = scmp.ge.s32.totalorder %s29, 1
    %s31 = scalar_select %p30, 0, %s29
    %s32 = sadd.s32 1, %s16
    %s33 = scalar_select %p30, %s32, %s16
    %p34 = scmp.ge.s32.totalorder %s33, 2
    %s35 = scalar_select %p34, 0, %s33
    %s36 = ssub.s32 %s18, %s27
    %p37 = scmp.eq.s32.totalorder %s36, 0
    %s39 = sadd.s32 %s38, 1
    %s40 = scalar_select %p37, %s38, %s39
    %p43 = pneg %p37
    %p44 = scmp.eq.s32.totalorder %s9, 1
    %p45 = por %p43, %p44
    %p46 = scmp.ne.s32.totalorder %s38, %s41
    %p47 = scmp.eq.s32.totalorder %s9, 0
    %p48 = por %p46, %p47
    %p49 = scmp.ne.s32.totalorder %s38, %s41
    %p50 = scmp.eq.s32.totalorder %s14, 1
    %p51 = por %p49, %p50
    %p52 = scmp.ne.s32.totalorder %s41, %s42
    %p53 = scmp.eq.s32.totalorder %s14, 0
    %p54 = por %p52, %p53
    %p55 = scmp.ne.s32.totalorder %s41, %s42
    %p56 = scmp.eq.s32.totalorder %s15, 1
    %p57 = por %p55, %p56
    %p59 = scmp.ne.s32.totalorder %s42, %s58
    %p60 = scmp.eq.s32.totalorder %s15, 0
    %p61 = por %p59, %p60
    %s62 = ssub.s32 %s17, %s31
    %p63 = scmp.eq.s32.totalorder %s62, 0
    %s65 = sadd.s32 %s64, 1
    %s66 = scalar_select %p63, %s64, %s65
    %p69 = pneg %p63
    %p70 = scmp.eq.s32.totalorder %s9, 1
    %p71 = por %p69, %p70
    %p72 = scmp.ne.s32.totalorder %s64, %s67
    %p73 = scmp.eq.s32.totalorder %s9, 0
    %p74 = por %p72, %p73
    %p75 = scmp.ne.s32.totalorder %s64, %s67
    %p76 = scmp.eq.s32.totalorder %s14, 1
    %p77 = por %p75, %p76
    %p78 = scmp.ne.s32.totalorder %s67, %s68
    %p79 = scmp.eq.s32.totalorder %s14, 0
    %p80 = por %p78, %p79
    %p81 = scmp.ne.s32.totalorder %s67, %s68
    %p82 = scmp.eq.s32.totalorder %s15, 1
    %p83 = por %p81, %p82
    %p85 = scmp.ne.s32.totalorder %s68, %s84
    %p86 = scmp.eq.s32.totalorder %s15, 0
    %p87 = por %p85, %p86
    %s88 = ssub.s32 %s17, %s31
    %p89 = scmp.eq.s32.totalorder %s88, 0
    %s91 = sadd.s32 %s90, 1
    %s92 = scalar_select %p89, %s90, %s91
    %p95 = pneg %p89
    %p96 = scmp.eq.s32.totalorder %s9, 1
    %p97 = por %p95, %p96
    %p98 = scmp.ne.s32.totalorder %s90, %s93
    %p99 = scmp.eq.s32.totalorder %s9, 0
    %p100 = por %p98, %p99
    %p101 = scmp.ne.s32.totalorder %s90, %s93
    %p102 = scmp.eq.s32.totalorder %s14, 1
    %p103 = por %p101, %p102
    %p104 = scmp.ne.s32.totalorder %s93, %s94
    %p105 = scmp.eq.s32.totalorder %s14, 0
    %p106 = por %p104, %p105
    %p107 = scmp.ne.s32.totalorder %s93, %s94
    %p108 = scmp.eq.s32.totalorder %s15, 1
    %p109 = por %p107, %p108
    %p111 = scmp.ne.s32.totalorder %s94, %s110
    %p112 = scmp.eq.s32.totalorder %s15, 0
    %p113 = por %p111, %p112
    %s114 = smul.u32 %s16, %s18
    %s115 = smul.u32 %s16, %s17
    %s116 = smul.u32 %s35, %s27
    %s117 = smul.u32 %s35, %s31
    %s118 = ssub.s32 %s114, %s116
    %s119 = ssub.s32 %s115, %s117
    %s120 = sor.u32 %s118, %s119
    %p121 = scmp.eq.s32.totalorder %s120, 0
    %s123 = sadd.s32 %s122, 1
    %s124 = scalar_select %p121, %s122, %s123
    %p127 = pneg %p121
    %p128 = scmp.eq.s32.totalorder %s9, 1
    %p129 = por %p127, %p128
    %p130 = scmp.ne.s32.totalorder %s122, %s125
    %p131 = scmp.eq.s32.totalorder %s9, 0
    %p132 = por %p130, %p131
    %p133 = scmp.ne.s32.totalorder %s122, %s125
    %p134 = scmp.eq.s32.totalorder %s14, 1
    %p135 = por %p133, %p134
    %p136 = scmp.ne.s32.totalorder %s125, %s126
    %p137 = scmp.eq.s32.totalorder %s14, 0
    %p138 = por %p136, %p137
    %p139 = scmp.ne.s32.totalorder %s125, %s126
    %p140 = scmp.eq.s32.totalorder %s15, 1
    %p141 = por %p139, %p140
    %p143 = scmp.ne.s32.totalorder %s126, %s142
    %p144 = scmp.eq.s32.totalorder %s15, 0
    %p145 = por %p143, %p144
    %p146 = scmp.le.s32.totalorder 1, %s9
    %p147 = scmp.lt.s32.totalorder %s9, 3
    %p148 = pnand %p146, %p147
    %p149 = pneg %p148
    // Predicated region
    $region9: #{v_encoder_forward.1} parent=5 // pred_check
      _
    $region10: #{v_encoder_forward.1} parent=5 // pred_check_branch
      %151 = sbr.rel (%p148) target = $region12
    $region11: #{v_encoder_forward.1} parent=5 // pred_region
      %s152 = ssub.s32 %s9, 1
      // Predicated region
      $region13: #{v_encoder_forward.1} parent=11 // pred_check
        %p153 = pneg %p54
      $region14: #{v_encoder_forward.1} parent=11 // pred_check_branch
        %155 = sbr.rel (%p153) target = $region16
      $region15: #{v_encoder_forward.1} parent=11 // pred_region
        %s156 = smul.u32 2, %s21
        %p157 = scmp.lt.s32.totalorder %s156, 1
        %s158 = scalar_select %p157, %s156, 1
        %s159 = smul.addr %s158, 8
        %s160 = scalar_lea.vmem %s0, %s159
        %s161 = smul.u32 2, %s21
      $region16: #{v_encoder_forward.1} parent=11 // pred_fallthru
        _
      // Predicated region
      $region17: #{v_encoder_forward.1} parent=11 // pred_check
        %p162 = pneg %p80
      $region18: #{v_encoder_forward.1} parent=11 // pred_check_branch
        %164 = sbr.rel (%p162) target = $region20
      $region19: #{v_encoder_forward.1} parent=11 // pred_region
        %p165 = scmp.lt.s32.totalorder %s20, 0
        %s166 = scalar_select %p165, %s20, 0
        %s167 = smul.addr %s166, 4
        %s168 = scalar_lea.vmem %s1, %s167
      $region20: #{v_encoder_forward.1} parent=11 // pred_fallthru
        _
      // Predicated region
      $region21: #{v_encoder_forward.1} parent=11 // pred_check
        %p169 = pneg %p106
      $region22: #{v_encoder_forward.1} parent=11 // pred_check_branch
        %171 = sbr.rel (%p169) target = $region24
      $region23: #{v_encoder_forward.1} parent=11 // pred_region
        %p172 = scmp.lt.s32.totalorder %s20, 0
        %s173 = scalar_select %p172, %s20, 0
        %s174 = smul.addr %s173, 2
        %s175 = scalar_lea.vmem %s2, %s174
      $region24: #{v_encoder_forward.1} parent=11 // pred_fallthru
        _
    $region12: #{v_encoder_forward.1} parent=5 // pred_fallthru
      _
    %p176 = scmp.lt.s32.totalorder %s9, 2
    // Predicated region
    $region25: #{v_encoder_forward.1} parent=5 // pred_check
      %p177 = pneg %p176
    $region26: #{v_encoder_forward.1} parent=5 // pred_check_branch
      %179 = sbr.rel (%p177) target = $region28
    $region27: #{v_encoder_forward.1} parent=5 // pred_region
      _
    $region28: #{v_encoder_forward.1} parent=5 // pred_fallthru
      _
    %p180 = scmp.le.s32.totalorder 1, %s9
    %p181 = scmp.lt.s32.totalorder %s9, 3
    %p182 = pnand %p180, %p181
    %p183 = pneg %p182
    // Predicated region
    $region29: #{v_encoder_forward.1} parent=5 // pred_check
      _
    $region30: #{v_encoder_forward.1} parent=5 // pred_check_branch
      %185 = sbr.rel (%p182) target = $region32
    $region31: #{v_encoder_forward.1} parent=5 // pred_region
      %s186 = ssub.s32 %s9, 1
      %s187 = smul.u32 2, %s21
      %p188 = scmp.lt.s32.totalorder %s187, 1
      %s189 = scalar_select %p188, %s187, 1
      %s190 = smul.addr %s189, 8
      %s191 = scalar_lea.vmem %s0, %s190
      %p192 = pneg %p54
      %p193 = pneg %p51
      %p194 = scmp.lt.s32.totalorder %s20, 0
      %s195 = scalar_select %p194, %s20, 0
      %s196 = smul.addr %s195, 4
      %s197 = scalar_lea.vmem %s1, %s196
      %p198 = pneg %p80
      %p199 = pneg %p77
      %p200 = scmp.lt.s32.totalorder %s20, 0
      %s201 = scalar_select %p200, %s20, 0
      %s202 = smul.addr %s201, 2
      %s203 = scalar_lea.vmem %s2, %s202
      %p204 = pneg %p106
      %p205 = pneg %p103
      %p206 = pneg %p138
      %p207 = pneg %p135
      %s208 = smul.u32 %s19, %s21
      %s209 = smul.u32 %s19, %s20
      %s210 = smul.u32 2, %s208
      %p211 = scmp.lt.s32.totalorder %s210, 1
      %s212 = scalar_select %p211, %s210, 1
      %p213 = scmp.lt.s32.totalorder %s209, 0
      %s214 = scalar_select %p213, %s209, 0
      %s215 = sadd.s32 %s214, %s212
      %s216 = smul.addr %s215, 8
      %s217 = scalar_lea.vmem %s3, %s216
      %s218 = smul.u32 2, %s21
      %p219 = scmp.lt.s32.totalorder %s218, 1
      %s220 = scalar_select %p219, %s218, 1
      %s221 = smul.addr %s220, 8
      %s222 = scalar_lea.vmem %s0, %s221
      %s223 = smul.u32 2, %s21
      %p224 = scmp.lt.s32.totalorder %s20, 0
      %s225 = scalar_select %p224, %s20, 0
      %s226 = smul.addr %s225, 4
      %s227 = scalar_lea.vmem %s1, %s226
      %p228 = scmp.lt.s32.totalorder %s20, 0
      %s229 = scalar_select %p228, %s20, 0
      %s230 = smul.addr %s229, 2
      %s231 = scalar_lea.vmem %s2, %s230
      %s232 = smul.u32 %s19, %s21
      %s233 = smul.u32 %s19, %s20
      %s234 = smul.u32 2, %s232
      %p235 = scmp.lt.s32.totalorder %s234, 1
      %s236 = scalar_select %p235, %s234, 1
      %p237 = scmp.lt.s32.totalorder %s233, 0
      %s238 = scalar_select %p237, %s233, 0
      %s239 = sadd.s32 %s238, %s236
      %s240 = smul.addr %s239, 8
      %s241 = scalar_lea.vmem %s3, %s240
      %s242 = smul.u32 %s19, %s21
      %s243 = smul.u32 %s19, %s20
      %s244 = smul.u32 2, %s242
      %v246 = vld [vmem:[%s222] sm:$0xff]
      %v247 = vld [vmem:[%s222 + $0x8] sm:$0xff]
      %v248 = vpack.c.bf16 %v247, %v246
      %v249 = vld [vmem:[%s227] sm:$0xf]
      %v250 = vld [vmem:[%s227 + $0x4] sm:$0xf]
      %v251 = vld [vmem:[%s227 + $0x8] sm:$0xf]
      %v252 = vld [vmem:[%s227 + $0xc] sm:$0xf]
      %v253 = vld [vmem:[%s227 + $0x10] sm:$0xf]
      %v254 = vld [vmem:[%s227 + $0x14] sm:$0xf]
      %v255 = vld [vmem:[%s227 + $0x18] sm:$0xf]
      %v256 = vld [vmem:[%s227 + $0x1c] sm:$0xf]
      %v257 = vld [vmem:[%s227 + $0x20] sm:$0xf]
      %v258 = vld [vmem:[%s227 + $0x24] sm:$0xf]
      %v259 = vld [vmem:[%s227 + $0x28] sm:$0xf]
      %v260 = vld [vmem:[%s227 + $0x2c] sm:$0xf]
      %v261 = vld [vmem:[%s227 + $0x30] sm:$0xf]
      %v262 = vld [vmem:[%s227 + $0x34] sm:$0xf]
      %v263 = vld [vmem:[%s227 + $0x38] sm:$0xf]
      %v264 = vld [vmem:[%s227 + $0x3c] sm:$0xf]
      %v281 = vunpack.c.l.b16 %v249
      %v282 = vunpack.c.l.b16 %v250
      %v283 = vunpack.c.l.b16 %v251
      %v284 = vunpack.c.l.b16 %v252
      %v285 = vunpack.c.l.b16 %v253
      %v286 = vunpack.c.l.b16 %v254
      %v287 = vunpack.c.l.b16 %v255
      %v288 = vunpack.c.l.b16 %v256
      %v289 = vunpack.c.l.b16 %v257
      %v290 = vunpack.c.l.b16 %v258
      %v291 = vunpack.c.l.b16 %v259
      %v292 = vunpack.c.l.b16 %v260
      %v293 = vunpack.c.l.b16 %v261
      %v294 = vunpack.c.l.b16 %v262
      %v295 = vunpack.c.l.b16 %v263
      %v296 = vunpack.c.l.b16 %v264
      %v297 = vpack.c.b16 %v282, %v281
      %v298 = vpack.c.b16 %v284, %v283
      %v299 = vpack.c.b16 %v286, %v285
      %v300 = vpack.c.b16 %v288, %v287
      %v301 = vpack.c.b16 %v290, %v289
      %v302 = vpack.c.b16 %v292, %v291
      %v303 = vpack.c.b16 %v294, %v293
      %v304 = vpack.c.b16 %v296, %v295
      %313 = vmatprep.subr.bf16.mxu0 0
      %314 = vmatpush1.bf16.msra.mxu0 %v304
      %315 = vmatprep.subr.bf16.mxu0 0
      %316 = vmatpush1.bf16.msra.mxu0 %v303
      %317 = vmatprep.subr.bf16.mxu0 0
      %318 = vmatpush1.bf16.msra.mxu0 %v302
      %319 = vmatprep.subr.bf16.mxu0 0
      %320 = vmatpush1.bf16.msra.mxu0 %v301
      %321 = vmatprep.subr.bf16.mxu0 0
      %322 = vmatpush1.bf16.msra.mxu0 %v300
      %323 = vmatprep.subr.bf16.mxu0 0
      %324 = vmatpush1.bf16.msra.mxu0 %v299
      %325 = vmatprep.subr.bf16.mxu0 0
      %326 = vmatpush1.bf16.msra.mxu0 %v298
      %327 = vmatprep.subr.bf16.mxu0 0
      %328 = vmatpush1.bf16.msra.mxu0 %v297
      %329 = vmatprep.subr.bf16.mxu0 0
      %330 = vmatpush2.bf16.msra.mxu0 0
      %331 = vmatprep.subr.bf16.mxu0 0
      %332 = vmatpush2.bf16.msra.mxu0 0
      %333 = vmatprep.subr.bf16.mxu0 0
      %334 = vmatpush2.bf16.msra.mxu0 0
      %335 = vmatprep.subr.bf16.mxu0 0
      %336 = vmatpush2.bf16.msra.mxu0 0
      %337 = vmatprep.subr.bf16.mxu0 0
      %338 = vmatpush2.bf16.msra.mxu0 0
      %339 = vmatprep.subr.bf16.mxu0 0
      %340 = vmatpush2.bf16.msra.mxu0 0
      %341 = vmatprep.subr.bf16.mxu0 0
      %342 = vmatpush2.bf16.msra.mxu0 0
      %343 = vmatprep.subr.bf16.mxu0 0
      %344 = vmatpush2.bf16.msra.mxu0 0
      %345 = vmatprep.mubr.bf16.mxu0 0
      %346 = vmatmul.mubr.bf16.gmra.mxu0 %v248
      %v347 = vpop.f32.mrf.mxu0
      %v348 = vadd.f32 0.0, %v347
      %v349 = vpop.f32.mrf.mxu0
      %v350 = vpop.f32.mrf.mxu0
      %v351 = vadd.f32 0.0, %v350
      %v352 = vpop.f32.mrf.mxu0
      %353 = vdwg.mxu0
      %p354 = scmp.eq.s32.totalorder %s19, 0
      %p355 = scmp.eq.s32.totalorder %s20, 0
      %p356 = pnand %p354, %p355
      %p357 = pneg %p356
      %p358 = scmp.eq.s32.totalorder %s21, 0
      %p359 = pnand %p357, %p358
      %p360 = pneg %p359
      // Predicated region
      $region33: #{v_encoder_forward.1} parent=31 // pred_check
        _
      $region34: #{v_encoder_forward.1} parent=31 // pred_check_branch
        %362 = sbr.rel (%p359) target = $region36
      $region35: #{v_encoder_forward.1} parent=31 // pred_region
        %363 = vst [vmem:[#allocation2] sm:$0x3] 0.0
      $region36: #{v_encoder_forward.1} parent=31 // pred_fallthru
        _
      // Predicated region
      $region37: #{v_encoder_forward.1} parent=31 // pred_check
        %p364 = pneg %p354
      $region38: #{v_encoder_forward.1} parent=31 // pred_check_branch
        %366 = sbr.rel (%p364) target = $region40
      $region39: #{v_encoder_forward.1} parent=31 // pred_region
        %s367 = smul.u32 %s20, 2
        %s368 = scalar_lea.vmem [#allocation2], %s367
        %v369 = vld [vmem:[%s368] sm:$0x1]
        %v370 = vadd.f32 %v348, %v351
        %v371 = vrot.slane %v370, 4
        %v372 = vadd.f32 %v370, %v371
        %v373 = vrot.slane %v372, 2
        %v374 = vadd.f32 %v372, %v373
        %v375 = vrot.slane %v374, 1
        %v376 = vadd.f32 %v374, %v375
        %v377 = vadd.f32 %v369, %v376
        %378 = vst [vmem:[%s368] sm:$0x1] %v377
        %v379 = vld [vmem:[%s368 + $0x1] sm:$0x1]
        %v380 = vmul.f32 %v348, %v348
        %v381 = vmul.f32 %v351, %v351
        %v382 = vadd.f32 %v380, %v381
        %v383 = vrot.slane %v382, 4
        %v384 = vadd.f32 %v382, %v383
        %v385 = vrot.slane %v384, 2
        %v386 = vadd.f32 %v384, %v385
        %v387 = vrot.slane %v386, 1
        %v388 = vadd.f32 %v386, %v387
        %v389 = vadd.f32 %v379, %v388
        %390 = vst [vmem:[%s368 + $0x1] sm:$0x1] %v389
      $region40: #{v_encoder_forward.1} parent=31 // pred_fallthru
        _
      %p391 = scmp.eq.s32.totalorder %s19, 1
      %p392 = pnand %p391, %p358
      %p393 = pneg %p392
      // Predicated region
      $region41: #{v_encoder_forward.1} parent=31 // pred_check
        _
      $region42: #{v_encoder_forward.1} parent=31 // pred_check_branch
        %395 = sbr.rel (%p392) target = $region44
      $region43: #{v_encoder_forward.1} parent=31 // pred_region
        %s396 = smul.u32 %s20, 2
        %s397 = scalar_lea.vmem [#allocation2], %s396
        %v398 = vld [vmem:[%s397] sm:$0x1]
        %v399 = vmul.f32 %v398, 0.0625
        %v400 = vld [vmem:[%s397 + $0x1] sm:$0x1]
        %v401 = vmul.f32 %v400, 0.0625
        %v402 = vmul.f32 %v399, %v399
        %v403 = vsub.f32 %v401, %v402
        %v404 = vmax.f32 %v403, 0.0
        %v405 = vadd.f32 %v404, 1e-05
        %v406 = vrsqrt.pop %v405
        %v407 = vld [vmem:[%s231] sm:$0x1]
        %v408 = vmul.f32 %v407, %v406
        %v409 = vld [vmem:[%s231 + $0x1] sm:$0x1]
        %v410 = vmul.f32 %v399, %v408
        %v411 = vsub.f32 %v409, %v410
        %412 = vst [vmem:[%s397] sm:$0x1] %v408
        %413 = vst [vmem:[%s397 + $0x1] sm:$0x1] %v411
      $region44: #{v_encoder_forward.1} parent=31 // pred_fallthru
        _
      // Predicated region
      $region45: #{v_encoder_forward.1} parent=31 // pred_check
        %p414 = pneg %p391
      $region46: #{v_encoder_forward.1} parent=31 // pred_check_branch
        %416 = sbr.rel (%p414) target = $region48
      $region47: #{v_encoder_forward.1} parent=31 // pred_region
        %s417 = smul.u32 %s20, 2
        %s418 = scalar_lea.vmem [#allocation2], %s417
        %v419 = vld [vmem:[%s418] sm:$0x1]
        %v420 = vld [vmem:[%s418 + $0x1] sm:$0x1]
        %v421 = vlaneseq
        %v422 = vshrl.u32 %v421, 7
        %v423 = vsub.s32 0, %v422
        %v424 = vrot.slane %v419, %v423
        %v425 = vmul.f32 %v348, %v424
        %v426 = vmul.f32 %v351, %v424
        %v427 = vlaneseq
        %v428 = vshrl.u32 %v427, 7
        %v429 = vsub.s32 0, %v428
        %v430 = vrot.slane %v420, %v429
        %v431 = vadd.f32 %v425, %v430
        %v432 = vadd.f32 %v426, %v430
        %v433 = vmax.f32 %v431, 0.0
        %v434 = vmax.f32 %v432, 0.0
        %435 = vst [vmem:[%s241] sm:$0xff] %v433
        %436 = vst [vmem:[%s241 + $0x8] sm:$0xff] %v434
      $region48: #{v_encoder_forward.1} parent=31 // pred_fallthru
        _
      %s437 = smul.u32 %s19, %s21
      %s438 = smul.u32 %s19, %s20
      %s439 = smul.u32 2, %s437
      %p440 = scmp.lt.s32.totalorder %s439, 1
      %s441 = scalar_select %p440, %s439, 1
      %p442 = scmp.lt.s32.totalorder %s438, 0
      %s443 = scalar_select %p442, %s438, 0
      %s444 = sadd.s32 %s443, %s441
      %s445 = smul.addr %s444, 8
      %s446 = scalar_lea.vmem %s3, %s445
      // Predicated region
      $region49: #{v_encoder_forward.1} parent=31 // pred_check
        %p447 = pneg %p135
      $region50: #{v_encoder_forward.1} parent=31 // pred_check_branch
        %449 = sbr.rel (%p447) target = $region52
      $region51: #{v_encoder_forward.1} parent=31 // pred_region
        %s450 = smul.u32 %s19, %s21
        %s451 = smul.u32 %s19, %s20
        %s452 = smul.u32 2, %s450
      $region52: #{v_encoder_forward.1} parent=31 // pred_fallthru
        _
    $region32: #{v_encoder_forward.1} parent=5 // pred_fallthru
      _
    %p453 = scmp.le.s32.totalorder 2, %s9
    // Predicated region
    $region53: #{v_encoder_forward.1} parent=5 // pred_check
      %p454 = pneg %p453
    $region54: #{v_encoder_forward.1} parent=5 // pred_check_branch
      %456 = sbr.rel (%p454) target = $region56
    $region55: #{v_encoder_forward.1} parent=5 // pred_region
      %s457 = ssub.s32 %s9, 2
      // Predicated region
      $region57: #{v_encoder_forward.1} parent=55 // pred_check
        %p458 = pneg %p141
      $region58: #{v_encoder_forward.1} parent=55 // pred_check_branch
        %460 = sbr.rel (%p458) target = $region60
      $region59: #{v_encoder_forward.1} parent=55 // pred_region
        %s461 = smul.u32 %s22, %s24
        %s462 = smul.u32 %s22, %s23
        %s463 = smul.u32 2, %s461
        %p464 = scmp.lt.s32.totalorder %s463, 1
        %s465 = scalar_select %p464, %s463, 1
        %p466 = scmp.lt.s32.totalorder %s462, 0
        %s467 = scalar_select %p466, %s462, 0
        %s468 = sadd.s32 %s467, %s465
        %s469 = smul.addr %s468, 8
        %s470 = scalar_lea.vmem %s3, %s469
      $region60: #{v_encoder_forward.1} parent=55 // pred_fallthru
        _
    $region56: #{v_encoder_forward.1} parent=5 // pred_fallthru
      _
  $region6: #{v_encoder_forward.1} parent=0 // loop_footer
    %s13 = sadd.s32 1, %s9
  $region7: #{v_encoder_forward.1} parent=0 // loop_footer_branch
    %8 = sbr.rel target = $region3
  $region8: #{v_encoder_forward.1} parent=0 // loop_exit
    _

</llo_original>
